<compile_context>
chip_gen: v7x
topology: tpu7x:2x2x1
jax: 0.10.0
libtpu: 0.0.40
codegen_flags: <defaults>
</compile_context>

<pallas_src>
import math

import jax
import jax.numpy as jnp
from jax.experimental import pallas as pl
from jax.experimental.pallas import tpu as pltpu


def _round_up(x, m):
    return (x + m - 1) // m * m


def _pick_batch_tile(b, h, w):
    """Samples per grid step.

    Capped at ceil(b/2) so the 'parallel' batch axis always has >= 2 grid
    steps (lets v7x shard across both TensorCores), and at 4 so the static
    per-sample unroll stays small.
    """
    cap = max(1, (b + 1) // 2)
    if h * w > 128 * 128:
        cap = 1
    max_bt = max(1, min(cap, 4))
    for cand in range(max_bt, 0, -1):
        if b % cand == 0:
            return cand
    return 1


def _vmem_limit_bytes(vmem_est):
    """Generation-aware VMEM limit with headroom for compiler scratch."""
    try:
        info = pltpu.get_tpu_info()
        phys = int(getattr(info, "vmem_capacity_bytes", 64 * 1024 * 1024))
    except Exception:
        phys = 64 * 1024 * 1024          # conservative (v7x per-core) fallback
    cap = phys * 3 // 4                  # leave headroom below physical VMEM
    want = max(2 * vmem_est, 32 * 1024 * 1024)
    return int(max(min(want, cap), 16 * 1024 * 1024))


def _make_dab_kernel(H, W, KS, P, RB, WPAD, BT, VCH, N_ACC):
    """Build the Pallas kernel body for static shapes."""
    RBP = RB + 2 * P                     # allocated slab rows (max band + halo)

    def dab_kernel(dk_ref, prm_ref, x_ref, out_ref, slab_ref, rolled_ref):
        # dk_ref    : SMEM (b, KS*KS)      all samples' degradation-kernel taps
        # prm_ref   : SMEM (1, 2)          [conv_w, conv_b] of the 1x1 conv
        # x_ref     : VMEM (BT, H, W)      input planes (channel dim squeezed)
        # out_ref   : VMEM (BT, H, W)      output planes, true width
        # slab_ref  : VMEM (RBP, WPAD)     zero-halo band slab
        # rolled_ref: VMEM (VCH, RBP, WPAD) lane-rolled copies of the band
        conv_w = prm_ref[0, 0]
        conv_b = prm_ref[0, 1]

        # Halo-only memset: the right-pad lanes [W, WPAD) are never written by
        # the band fill, so one zeroing pass per grid step keeps them valid for
        # every sample/band (they supply the left/right conv padding through
        # the circular lane roll). No full-slab memset.
        slab_ref[:, W:WPAD] = jnp.zeros((RBP, WPAD - W), jnp.float32)

        for s in range(BT):              # BT <= 4: bounded static unroll
            g = pl.program_id(0) * BT + s    # global sample index

            for band_start in range(0, H, RB):   # in-kernel row banding
                rb = min(RB, H - band_start)     # static per band
                rbp = rb + 2 * P
                pad_lo = band_start - P          # first padded row this band reads
                lo = max(0, pad_lo)
                hi = min(H, band_start + rb + P)
                dst0 = lo - pad_lo               # 0 except for the first band
                nrows = hi - lo

                # Fused zero padding: zero rows only at the image top/bottom
                # boundary, then copy the interior rows (middle bands land at
                # sublane offset 0; only the first band starts at offset P).
                if dst0 > 0:
                    slab_ref[0:dst0, 0:W] = jnp.zeros((dst0, W), jnp.float32)
                if dst0 + nrows < rbp:
                    slab_ref[dst0 + nrows:rbp, 0:W] = jnp.zeros(
                        (rbp - dst0 - nrows, W), jnp.float32)
                slab_ref[dst0:dst0 + nrows, 0:W] = x_ref[s, lo:hi, :]

                band = slab_ref[0:rbp, :] if KS > 1 else None

                accs = [None] * N_ACC
                t = 0
                # Column offsets v processed in chunks so rolled temps stay
                # bounded for large ks (v7x VMEM).
                for v0 in range(0, KS, VCH):
                    chunk = list(range(v0, min(v0 + VCH, KS)))
                    slot_of = {}
                    slot = 0
                    for v in chunk:
                        if v == P:
                            continue     # zero shift: read the slab directly
                        sh = (P - v) % WPAD
                        rolled_ref[slot, 0:rbp, :] = pltpu.roll(
                            band, shift=sh, axis=1)
                        slot_of[v] = slot
                        slot += 1
                    for u in range(KS):
                        for v in chunk:
                            tap = dk_ref[g, u * KS + v]
                            if v == P:
                                win = slab_ref[u:u + rb, :]
                            else:
                                win = rolled_ref[slot_of[v], u:u + rb, :]
                            term = win * tap
                            a = t % N_ACC
                            t += 1
                            accs[a] = term if accs[a] is None else accs[a] + term
                acc = accs[0]
                for extra in accs[1:]:
                    if extra is not None:
                        acc = acc + extra

                # LeakyReLU(0.1) + 1x1 conv (scalar scale & bias), true-width store
                y = jnp.where(acc >= 0, acc, jnp.float32(0.1) * acc)
                out_ref[s, band_start:band_start + rb, :] = \
                    (conv_w * y + conv_b)[:, :W]

    return dab_kernel


@jax.jit
def dab_forward(x, d_kernel, conv_w, conv_b):
    """
    x        : (b, 1, h, w) float32, NCHW
    d_kernel : (b, l) float32, l = ks*ks, ks odd
    conv_w   : scalar float32 (Conv2d(1,1,1) weight)
    conv_b   : scalar float32 (Conv2d(1,1,1) bias)
    returns  : (b, 1, h, w) float32
    """
    b, c, h, w = x.shape
    assert c == 1, "DAB requires c == 1 (grouped conv + trailing Conv2d(1,1,1))"
    l = d_kernel.shape[1]
    ks = int(round(math.sqrt(l)))
    assert ks * ks == l and ks % 2 == 1
    p = (ks - 1) // 2

    wpad = _round_up(w + 2 * p, 128)     # lane width of the padded band slab
    rb = min(h, 64)                      # output rows per in-kernel band
    bt = _pick_batch_tile(b, h, w)
    vch = max(1, min(ks, 8))             # rolled-plane chunk size
    n_acc = min(4, ks * ks)              # 4 independent chains for 4 VALU slots

    params = jnp.stack([jnp.asarray(conv_w, jnp.float32),
                        jnp.asarray(conv_b, jnp.float32)]).reshape(1, 2)
    x3 = x.reshape(b, h, w).astype(jnp.float32)   # channel squeeze (free)

    kernel = _make_dab_kernel(h, w, ks, p, rb, wpad, bt, vch, n_acc)

    rbp = rb + 2 * p
    slab = rbp * wpad * 4
    vmem_est = (2 * bt * h * w * 4) * 2 + slab + vch * slab \
        + n_acc * rb * wpad * 4 + 2 * slab

    # TODO(synk): for planes where even the whole-plane I/O blocks exceed the
    # VMEM budget (e.g. >4k x 4k f32 on v7x), add halo'd row tiling as a second
    # grid axis on top of the in-kernel banding used here.

    out = pl.pallas_call(
        kernel,
        out_shape=jax.ShapeDtypeStruct((b, h, w), jnp.float32),
        grid=(b // bt,),
        in_specs=[
            # full-array SMEM operands (revisited, copied once); for very large
            # b * ks^2, switch to scalar prefetch / a flattened 1D layout.
            pl.BlockSpec((b, l), lambda i: (0, 0),
                         memory_space=pltpu.MemorySpace.SMEM),
            pl.BlockSpec((1, 2), lambda i: (0, 0),
                         memory_space=pltpu.MemorySpace.SMEM),
            pl.BlockSpec((bt, h, w), lambda i: (i, 0, 0)),
        ],
        out_specs=pl.BlockSpec((bt, h, w), lambda i: (i, 0, 0)),
        scratch_shapes=[pltpu.VMEM((rbp, wpad), jnp.float32),
                        pltpu.VMEM((vch, rbp, wpad), jnp.float32)],
        compiler_params=pltpu.CompilerParams(
            dimension_semantics=("parallel",),
            vmem_limit_bytes=_vmem_limit_bytes(vmem_est)),
    )(d_kernel.astype(jnp.float32), params, x3)

    return out.reshape(b, 1, h, w)


def dab_reference(x, d_kernel, conv_w, conv_b):
    """Pure-JAX reference of the PyTorch forward."""
    b, c, h, w = x.shape
    l = d_kernel.shape[1]
    ks = int(round(math.sqrt(l)))
    p = (ks - 1) // 2
    xpad = jnp.pad(x[:, 0], ((0, 0), (p, p), (p, p)))
    acc = jnp.zeros((b, h, w), jnp.float32)
    for u in range(ks):
        for v in range(ks):
            acc = acc + xpad[:, u:u + h, v:v + w] \
                * d_kernel[:, u * ks + v][:, None, None]
    y = jnp.where(acc >= 0, acc, 0.1 * acc)
    return (conv_w * y + conv_b)[:, None]


if __name__ == "__main__":
    key = jax.random.PRNGKey(0)

    def run_case(case_key, b, h, w, ks):
        k1, k2 = jax.random.split(case_key)
        x = jax.random.normal(k1, (b, 1, h, w), dtype=jnp.float32)
        d_kernel = jax.random.normal(k2, (b, ks * ks), dtype=jnp.float32)
        d_kernel = jax.nn.softmax(d_kernel, axis=-1)   # blur-like taps
        # deterministic Conv2d(1,1,1) parameters (synthetic init, no checkpoint)
        conv_w = jnp.float32(0.5)
        conv_b = jnp.float32(0.1)

        out = jax.block_until_ready(dab_forward(x, d_kernel, conv_w, conv_b))
        ref = dab_reference(x, d_kernel, conv_w, conv_b)
        assert out.shape == (b, 1, h, w)
        assert jnp.allclose(out, ref, atol=1e-5, rtol=1e-5), \
            f"mismatch for (b={b}, h={h}, w={w}, ks={ks})"

    k_a, k_b = jax.random.split(key)
    # primary small case (matches the module's expected usage)
    run_case(k_a, b=2, h=16, w=16, ks=3)
    # exercises batch packing (BT=2), multi-band H with a partial band,
    # a non-lane-aligned width and a larger degradation kernel.
    run_case(k_b, b=4, h=72, w=20, ks=5)

    print("KERNEL_OK")
</pallas_src>

<mosaic_0001>
module attributes {stable_mosaic.version = 11 : i64} {
  func.func @dab_kernel(%arg0: i32, %arg1: memref<2x9xf32, #tpu.memory_space<smem>>, %arg2: memref<1x2xf32, #tpu.memory_space<smem>>, %arg3: memref<1x16x16xf32, #tpu.memory_space<vmem>>, %arg4: memref<1x16x16xf32, #tpu.memory_space<vmem>>, %arg5: memref<18x128xf32, #tpu.memory_space<vmem>>, %arg6: memref<3x18x128xf32, #tpu.memory_space<vmem>>) attributes {dimension_semantics = [#tpu.dimension_semantics<parallel>], iteration_bounds = array<i64: 2>, scalar_prefetch = 0 : i64, scratch_operands = 2 : i64, tpu.core_type = #tpu.core_type<tc>, window_params = [{transform_indices = @transform_0, window_bounds = array<i64: 2, 9>}, {transform_indices = @transform_1, window_bounds = array<i64: 1, 2>}, {transform_indices = @transform_2, window_bounds = array<i64: 1, 16, 16>}, {transform_indices = @transform_3, window_bounds = array<i64: 1, 16, 16>}]} {
    %c0 = arith.constant 0 : index
    %c0_0 = arith.constant 0 : index
    %0 = memref.load %arg2[%c0, %c0_0] : memref<1x2xf32, #tpu.memory_space<smem>>
    %c0_1 = arith.constant 0 : index
    %c1 = arith.constant 1 : index
    %1 = memref.load %arg2[%c0_1, %c1] : memref<1x2xf32, #tpu.memory_space<smem>>
    %cst = arith.constant 0.000000e+00 : f32
    %2 = vector.broadcast %cst : f32 to vector<18x112xf32>
    %c0_2 = arith.constant 0 : index
    %c16 = arith.constant 16 : index
    %3 = vector.load %arg5[%c0_2, %c16] : memref<18x128xf32, #tpu.memory_space<vmem>>, vector<18x112xf32>
    tpu.vector_store %arg5[%c0_2, %c16], %2 {strides = array<i32>} : memref<18x128xf32, #tpu.memory_space<vmem>>, vector<18x112xf32>,
    %c1_i32 = arith.constant 1 : i32
    %4 = arith.muli %arg0, %c1_i32 : i32
    %c0_i32 = arith.constant 0 : i32
    %5 = arith.addi %4, %c0_i32 : i32
    %cst_3 = arith.constant 0.000000e+00 : f32
    %6 = vector.broadcast %cst_3 : f32 to vector<1x16xf32>
    %c0_4 = arith.constant 0 : index
    %c0_5 = arith.constant 0 : index
    %7 = vector.load %arg5[%c0_4, %c0_5] : memref<18x128xf32, #tpu.memory_space<vmem>>, vector<1x16xf32>
    tpu.vector_store %arg5[%c0_4, %c0_5], %6 {strides = array<i32>} : memref<18x128xf32, #tpu.memory_space<vmem>>, vector<1x16xf32>,
    %cst_6 = arith.constant 0.000000e+00 : f32
    %8 = vector.broadcast %cst_6 : f32 to vector<1x16xf32>
    %c17 = arith.constant 17 : index
    %c0_7 = arith.constant 0 : index
    %9 = vector.load %arg5[%c17, %c0_7] : memref<18x128xf32, #tpu.memory_space<vmem>>, vector<1x16xf32>
    tpu.vector_store %arg5[%c17, %c0_7], %8 {strides = array<i32>} : memref<18x128xf32, #tpu.memory_space<vmem>>, vector<1x16xf32>,
    %c0_8 = arith.constant 0 : index
    %c0_9 = arith.constant 0 : index
    %c0_10 = arith.constant 0 : index
    %10 = vector.load %arg3[%c0_8, %c0_9, %c0_10] : memref<1x16x16xf32, #tpu.memory_space<vmem>>, vector<1x16x16xf32>
    %11 = vector.shape_cast %10 : vector<1x16x16xf32> to vector<16x16xf32>
    %c1_11 = arith.constant 1 : index
    %c0_12 = arith.constant 0 : index
    %12 = vector.load %arg5[%c1_11, %c0_12] : memref<18x128xf32, #tpu.memory_space<vmem>>, vector<16x16xf32>
    tpu.vector_store %arg5[%c1_11, %c0_12], %11 {strides = array<i32>} : memref<18x128xf32, #tpu.memory_space<vmem>>, vector<16x16xf32>,
    %c0_13 = arith.constant 0 : index
    %c0_14 = arith.constant 0 : index
    %13 = vector.load %arg5[%c0_13, %c0_14] : memref<18x128xf32, #tpu.memory_space<vmem>>, vector<18x128xf32>
    %c1_i32_15 = arith.constant 1 : i32
    %14 = tpu.dynamic_rotate %13 by %c1_i32_15 dim 1 : vector<18x128xf32>, i32 -> vector<18x128xf32>
    %c0_16 = arith.constant 0 : index
    %c0_17 = arith.constant 0 : index
    %c0_18 = arith.constant 0 : index
    %15 = vector.load %arg6[%c0_16, %c0_17, %c0_18] : memref<3x18x128xf32, #tpu.memory_space<vmem>>, vector<1x18x128xf32>
    %16 = vector.shape_cast %15 : vector<1x18x128xf32> to vector<18x128xf32>
    %17 = vector.shape_cast %14 : vector<18x128xf32> to vector<1x18x128xf32>
    tpu.vector_store %arg6[%c0_16, %c0_17, %c0_18], %17 {strides = array<i32>} : memref<3x18x128xf32, #tpu.memory_space<vmem>>, vector<1x18x128xf32>,
    %c127_i32 = arith.constant 127 : i32
    %18 = tpu.dynamic_rotate %13 by %c127_i32 dim 1 : vector<18x128xf32>, i32 -> vector<18x128xf32>
    %c1_19 = arith.constant 1 : index
    %c0_20 = arith.constant 0 : index
    %c0_21 = arith.constant 0 : index
    %19 = vector.load %arg6[%c1_19, %c0_20, %c0_21] : memref<3x18x128xf32, #tpu.memory_space<vmem>>, vector<1x18x128xf32>
    %20 = vector.shape_cast %19 : vector<1x18x128xf32> to vector<18x128xf32>
    %21 = vector.shape_cast %18 : vector<18x128xf32> to vector<1x18x128xf32>
    tpu.vector_store %arg6[%c1_19, %c0_20, %c0_21], %21 {strides = array<i32>} : memref<3x18x128xf32, #tpu.memory_space<vmem>>, vector<1x18x128xf32>,
    %22 = arith.index_cast %5 : i32 to index
    %c0_22 = arith.constant 0 : index
    %23 = memref.load %arg1[%22, %c0_22] : memref<2x9xf32, #tpu.memory_space<smem>>
    %c0_23 = arith.constant 0 : index
    %c0_24 = arith.constant 0 : index
    %c0_25 = arith.constant 0 : index
    %24 = vector.load %arg6[%c0_23, %c0_24, %c0_25] : memref<3x18x128xf32, #tpu.memory_space<vmem>>, vector<1x16x128xf32>
    %25 = vector.shape_cast %24 : vector<1x16x128xf32> to vector<16x128xf32>
    %26 = vector.broadcast %23 : f32 to vector<16x128xf32>
    %27 = arith.mulf %25, %26 : vector<16x128xf32>
    %28 = arith.index_cast %5 : i32 to index
    %c1_26 = arith.constant 1 : index
    %29 = memref.load %arg1[%28, %c1_26] : memref<2x9xf32, #tpu.memory_space<smem>>
    %c0_27 = arith.constant 0 : index
    %c0_28 = arith.constant 0 : index
    %30 = vector.load %arg5[%c0_27, %c0_28] : memref<18x128xf32, #tpu.memory_space<vmem>>, vector<16x128xf32>
    %31 = vector.broadcast %29 : f32 to vector<16x128xf32>
    %32 = arith.mulf %30, %31 : vector<16x128xf32>
    %33 = arith.index_cast %5 : i32 to index
    %c2 = arith.constant 2 : index
    %34 = memref.load %arg1[%33, %c2] : memref<2x9xf32, #tpu.memory_space<smem>>
    %c1_29 = arith.constant 1 : index
    %c0_30 = arith.constant 0 : index
    %c0_31 = arith.constant 0 : index
    %35 = vector.load %arg6[%c1_29, %c0_30, %c0_31] : memref<3x18x128xf32, #tpu.memory_space<vmem>>, vector<1x16x128xf32>
    %36 = vector.shape_cast %35 : vector<1x16x128xf32> to vector<16x128xf32>
    %37 = vector.broadcast %34 : f32 to vector<16x128xf32>
    %38 = arith.mulf %36, %37 : vector<16x128xf32>
    %39 = arith.index_cast %5 : i32 to index
    %c3 = arith.constant 3 : index
    %40 = memref.load %arg1[%39, %c3] : memref<2x9xf32, #tpu.memory_space<smem>>
    %c0_32 = arith.constant 0 : index
    %c1_33 = arith.constant 1 : index
    %c0_34 = arith.constant 0 : index
    %41 = vector.load %arg6[%c0_32, %c1_33, %c0_34] : memref<3x18x128xf32, #tpu.memory_space<vmem>>, vector<1x16x128xf32>
    %42 = vector.shape_cast %41 : vector<1x16x128xf32> to vector<16x128xf32>
    %43 = vector.broadcast %40 : f32 to vector<16x128xf32>
    %44 = arith.mulf %42, %43 : vector<16x128xf32>
    %45 = arith.index_cast %5 : i32 to index
    %c4 = arith.constant 4 : index
    %46 = memref.load %arg1[%45, %c4] : memref<2x9xf32, #tpu.memory_space<smem>>
    %c1_35 = arith.constant 1 : index
    %c0_36 = arith.constant 0 : index
    %47 = vector.load %arg5[%c1_35, %c0_36] : memref<18x128xf32, #tpu.memory_space<vmem>>, vector<16x128xf32>
    %48 = vector.broadcast %46 : f32 to vector<16x128xf32>
    %49 = arith.mulf %47, %48 : vector<16x128xf32>
    %50 = arith.addf %27, %49 : vector<16x128xf32>
    %51 = arith.index_cast %5 : i32 to index
    %c5 = arith.constant 5 : index
    %52 = memref.load %arg1[%51, %c5] : memref<2x9xf32, #tpu.memory_space<smem>>
    %c1_37 = arith.constant 1 : index
    %c1_38 = arith.constant 1 : index
    %c0_39 = arith.constant 0 : index
    %53 = vector.load %arg6[%c1_37, %c1_38, %c0_39] : memref<3x18x128xf32, #tpu.memory_space<vmem>>, vector<1x16x128xf32>
    %54 = vector.shape_cast %53 : vector<1x16x128xf32> to vector<16x128xf32>
    %55 = vector.broadcast %52 : f32 to vector<16x128xf32>
    %56 = arith.mulf %54, %55 : vector<16x128xf32>
    %57 = arith.addf %32, %56 : vector<16x128xf32>
    %58 = arith.index_cast %5 : i32 to index
    %c6 = arith.constant 6 : index
    %59 = memref.load %arg1[%58, %c6] : memref<2x9xf32, #tpu.memory_space<smem>>
    %c0_40 = arith.constant 0 : index
    %c2_41 = arith.constant 2 : index
    %c0_42 = arith.constant 0 : index
    %60 = vector.load %arg6[%c0_40, %c2_41, %c0_42] : memref<3x18x128xf32, #tpu.memory_space<vmem>>, vector<1x16x128xf32>
    %61 = vector.shape_cast %60 : vector<1x16x128xf32> to vector<16x128xf32>
    %62 = vector.broadcast %59 : f32 to vector<16x128xf32>
    %63 = arith.mulf %61, %62 : vector<16x128xf32>
    %64 = arith.addf %38, %63 : vector<16x128xf32>
    %65 = arith.index_cast %5 : i32 to index
    %c7 = arith.constant 7 : index
    %66 = memref.load %arg1[%65, %c7] : memref<2x9xf32, #tpu.memory_space<smem>>
    %c2_43 = arith.constant 2 : index
    %c0_44 = arith.constant 0 : index
    %67 = vector.load %arg5[%c2_43, %c0_44] : memref<18x128xf32, #tpu.memory_space<vmem>>, vector<16x128xf32>
    %68 = vector.broadcast %66 : f32 to vector<16x128xf32>
    %69 = arith.mulf %67, %68 : vector<16x128xf32>
    %70 = arith.addf %44, %69 : vector<16x128xf32>
    %71 = arith.index_cast %5 : i32 to index
    %c8 = arith.constant 8 : index
    %72 = memref.load %arg1[%71, %c8] : memref<2x9xf32, #tpu.memory_space<smem>>
    %c1_45 = arith.constant 1 : index
    %c2_46 = arith.constant 2 : index
    %c0_47 = arith.constant 0 : index
    %73 = vector.load %arg6[%c1_45, %c2_46, %c0_47] : memref<3x18x128xf32, #tpu.memory_space<vmem>>, vector<1x16x128xf32>
    %74 = vector.shape_cast %73 : vector<1x16x128xf32> to vector<16x128xf32>
    %75 = vector.broadcast %72 : f32 to vector<16x128xf32>
    %76 = arith.mulf %74, %75 : vector<16x128xf32>
    %77 = arith.addf %50, %76 : vector<16x128xf32>
    %78 = arith.addf %77, %57 : vector<16x128xf32>
    %79 = arith.addf %78, %64 : vector<16x128xf32>
    %80 = arith.addf %79, %70 : vector<16x128xf32>
    %cst_48 = arith.constant 0.000000e+00 : f32
    %81 = vector.broadcast %cst_48 : f32 to vector<16x128xf32>
    %82 = arith.cmpf oge, %80, %81 : vector<16x128xf32>
    %cst_49 = arith.constant 1.000000e-01 : f32
    %83 = vector.broadcast %cst_49 : f32 to vector<16x128xf32>
    %84 = arith.mulf %83, %80 : vector<16x128xf32>
    %85 = arith.select %82, %80, %84 : vector<16x128xi1>, vector<16x128xf32>
    %86 = vector.broadcast %0 : f32 to vector<16x128xf32>
    %87 = arith.mulf %86, %85 : vector<16x128xf32>
    %88 = vector.broadcast %1 : f32 to vector<16x128xf32>
    %89 = arith.addf %87, %88 : vector<16x128xf32>
    %90 = vector.extract_strided_slice %89 {offsets = [0, 0], sizes = [16, 16], strides = [1, 1]} : vector<16x128xf32> to vector<16x16xf32>
    %c0_50 = arith.constant 0 : index
    %c0_51 = arith.constant 0 : index
    %c0_52 = arith.constant 0 : index
    %91 = vector.load %arg4[%c0_50, %c0_51, %c0_52] : memref<1x16x16xf32, #tpu.memory_space<vmem>>, vector<1x16x16xf32>
    %92 = vector.shape_cast %91 : vector<1x16x16xf32> to vector<16x16xf32>
    %93 = vector.shape_cast %90 : vector<16x16xf32> to vector<1x16x16xf32>
    tpu.vector_store %arg4[%c0_50, %c0_51, %c0_52], %93 {strides = array<i32>} : memref<1x16x16xf32, #tpu.memory_space<vmem>>, vector<1x16x16xf32>,
    return
  }
  func.func @transform_0(%arg0: i32) -> (i32, i32) {
    %c0_i32 = arith.constant 0 : i32
    %c0_i32_0 = arith.constant 0 : i32
    %c0_i32_1 = arith.constant 0 : i32
    return %c0_i32, %c0_i32_0 : i32, i32
  }
  func.func @transform_1(%arg0: i32) -> (i32, i32) {
    %c0_i32 = arith.constant 0 : i32
    %c0_i32_0 = arith.constant 0 : i32
    %c0_i32_1 = arith.constant 0 : i32
    return %c0_i32, %c0_i32_0 : i32, i32
  }
  func.func @transform_2(%arg0: i32) -> (i32, i32, i32) {
    %c0_i32 = arith.constant 0 : i32
    %c0_i32_0 = arith.constant 0 : i32
    %c0_i32_1 = arith.constant 0 : i32
    return %arg0, %c0_i32, %c0_i32_0 : i32, i32, i32
  }
  func.func @transform_3(%arg0: i32) -> (i32, i32, i32) {
    %c0_i32 = arith.constant 0 : i32
    %c0_i32_0 = arith.constant 0 : i32
    %c0_i32_1 = arith.constant 0 : i32
    return %arg0, %c0_i32, %c0_i32_0 : i32, i32, i32
  }
}

</mosaic_0001>

<llo_original>
// kernel: dab_forward.1
$region0: #{dab_forward.1}
  #allocation0 [shape = 'u32[]', space=smem, size = 0x4, offset = 0x4, fixed_abs, tag = 'smem constant byte address 0x4 - core index']
  #allocation1 [shape = 'u32[144,128]{1,0:T(1,128)}', space=vmem, size = 0x12000, scoped, tag = 'internal scratch']
  #allocation2 [shape = 'f32[18,128]{1,0:T(8,128)}', space=vmem, size = 0x3000, scoped, tag = 'scratch operand']
  #allocation3 [shape = 'f32[3,18,128]{2,1,0:T(8,128)}', space=vmem, size = 0x9000, scoped, tag = 'scratch operand']
  %s0 = inlined_call_operand.vmem [shape: f32[2,9], index: 0, kind: input, shape index: {}]
  %s1 = inlined_call_operand.vmem [shape: f32[1,2], index: 1, kind: input, shape index: {}]
  %s2 = inlined_call_operand.hbm [shape: f32[2,16,16], index: 2, kind: input, shape index: {}]
  %s3 = inlined_call_operand.hbm [shape: f32[2,16,16], index: 3, kind: output, shape index: {}]
  %s4 = sld [smem:[#allocation0]]
  $region57: #{dab_forward.1} parent=0
    _
  %s6 = ssub.s32 1, %s4
  %s7 = scalar_select 0, %s6, %s4
  $region1: #{dab_forward.1} parent=0
    #allocation4 [shape = 'u8[1024]{0}', space=smem, size = 0x400, scoped, tag = 'input window, operand 0, single buffered']
    #allocation5 [shape = 's32[2]{0}', space=sflag, size = 0x8, scoped, tag = 'scoped memory for dab_forward.1']
    #allocation6 [shape = 's32[2]{0}', space=sflag, size = 0x8, scoped, tag = 'scoped memory for dab_forward.1']
    #allocation7 [shape = 's32[2]{0}', space=sflag, size = 0x8, scoped, tag = 'scoped memory for dab_forward.1']
    #allocation8 [shape = 'u8[512]{0}', space=smem, size = 0x200, scoped, tag = 'input window, operand 1, single buffered']
    #allocation9 [shape = 's32[1]{0}', space=sflag, size = 0x4, scoped, tag = 'scoped memory for dab_forward.1']
    #allocation10 [shape = 'u8[16384]{0}', space=vmem, size = 0x4000, scoped, tag = 'input window, operand 2']
    #allocation11 [shape = 'u8[16384]{0}', space=vmem, size = 0x4000, scoped, tag = 'output window, operand 0']
    %8 = vsyncpa [#allocation7], 0
    %9 = vsyncpa [#allocation9], 0
    %10 = vsyncpa [#allocation5], 0
    %s11 = scalar_lea.sflag [#allocation5], 1
    %12 = vsyncpa %s11, 0
    %13 = vsyncpa [#allocation6], 0
    %s14 = scalar_lea.sflag [#allocation6], 1
    %15 = vsyncpa %s14, 0
    loop: start=0, step=1, limit=4
    $region2: #{dab_forward.1} parent=1 // loop_pre_header
      _
    $region3: #{dab_forward.1} parent=1 // loop_header
      %s17 = sphi 0, %s21
      %p18 = scmp.ge.s32.totalorder %s17, 4
      %s25 = sphi 0, %s25
      %s27 = sphi 0, %s25
      %s28 = sphi 0, %s27
      %s42 = sphi 0, %s28
      %s46 = sphi 0, %s46
      %s48 = sphi 0, %s46
      %s49 = sphi 0, %s48
      %s63 = sphi 0, %s49
      %s69 = sphi 0, %s71
      %s72 = sphi 0, %s69
      %s73 = sphi 0, %s72
      %s89 = sphi 0, %s73
      %s95 = sphi 0, %s97
      %s98 = sphi 0, %s95
      %s99 = sphi 0, %s98
      %s115 = sphi 0, %s99
    $region4: #{dab_forward.1} parent=1 // loop_header_branch
      %20 = sbr.rel (%p18) target = $region8
    $region5: #{dab_forward.1} parent=1 // loop_body
      %s22 = ssub.s32 %s17, 1
      %s23 = ssub.s32 %s17, 2
      %s24 = sadd.s32 %s17, 1
      %s26 = sadd.s32 %s25, 1
      %p29 = scmp.eq.s32.totalorder %s17, 1
      %p30 = scmp.ne.s32.totalorder %s25, %s27
      %p31 = scmp.eq.s32.totalorder %s17, 0
      %p32 = por %p30, %p31
      %p33 = scmp.ne.s32.totalorder %s25, %s27
      %p34 = scmp.eq.s32.totalorder %s22, 1
      %p35 = por %p33, %p34
      %p36 = scmp.ne.s32.totalorder %s27, %s28
      %p37 = scmp.eq.s32.totalorder %s22, 0
      %p38 = por %p36, %p37
      %p39 = scmp.ne.s32.totalorder %s27, %s28
      %p40 = scmp.eq.s32.totalorder %s23, 1
      %p41 = por %p39, %p40
      %p43 = scmp.ne.s32.totalorder %s28, %s42
      %p44 = scmp.eq.s32.totalorder %s23, 0
      %p45 = por %p43, %p44
      %s47 = sadd.s32 %s46, 1
      %p50 = scmp.eq.s32.totalorder %s17, 1
      %p51 = scmp.ne.s32.totalorder %s46, %s48
      %p52 = scmp.eq.s32.totalorder %s17, 0
      %p53 = por %p51, %p52
      %p54 = scmp.ne.s32.totalorder %s46, %s48
      %p55 = scmp.eq.s32.totalorder %s22, 1
      %p56 = por %p54, %p55
      %p57 = scmp.ne.s32.totalorder %s48, %s49
      %p58 = scmp.eq.s32.totalorder %s22, 0
      %p59 = por %p57, %p58
      %p60 = scmp.ne.s32.totalorder %s48, %s49
      %p61 = scmp.eq.s32.totalorder %s23, 1
      %p62 = por %p60, %p61
      %p64 = scmp.ne.s32.totalorder %s49, %s63
      %p65 = scmp.eq.s32.totalorder %s23, 0
      %p66 = por %p64, %p65
      %s67 = ssub.s32 %s17, %s24
      %p68 = scmp.eq.s32.totalorder %s67, 0
      %s70 = sadd.s32 %s69, 1
      %s71 = scalar_select %p68, %s69, %s70
      %p74 = pneg %p68
      %p75 = scmp.eq.s32.totalorder %s17, 1
      %p76 = por %p74, %p75
      %p77 = scmp.ne.s32.totalorder %s69, %s72
      %p78 = scmp.eq.s32.totalorder %s17, 0
      %p79 = por %p77, %p78
      %p80 = scmp.ne.s32.totalorder %s69, %s72
      %p81 = scmp.eq.s32.totalorder %s22, 1
      %p82 = por %p80, %p81
      %p83 = scmp.ne.s32.totalorder %s72, %s73
      %p84 = scmp.eq.s32.totalorder %s22, 0
      %p85 = por %p83, %p84
      %p86 = scmp.ne.s32.totalorder %s72, %s73
      %p87 = scmp.eq.s32.totalorder %s23, 1
      %p88 = por %p86, %p87
      %p90 = scmp.ne.s32.totalorder %s73, %s89
      %p91 = scmp.eq.s32.totalorder %s23, 0
      %p92 = por %p90, %p91
      %s93 = ssub.s32 %s17, %s24
      %p94 = scmp.eq.s32.totalorder %s93, 0
      %s96 = sadd.s32 %s95, 1
      %s97 = scalar_select %p94, %s95, %s96
      %p100 = pneg %p94
      %p101 = scmp.eq.s32.totalorder %s17, 1
      %p102 = por %p100, %p101
      %p103 = scmp.ne.s32.totalorder %s95, %s98
      %p104 = scmp.eq.s32.totalorder %s17, 0
      %p105 = por %p103, %p104
      %p106 = scmp.ne.s32.totalorder %s95, %s98
      %p107 = scmp.eq.s32.totalorder %s22, 1
      %p108 = por %p106, %p107
      %p109 = scmp.ne.s32.totalorder %s98, %s99
      %p110 = scmp.eq.s32.totalorder %s22, 0
      %p111 = por %p109, %p110
      %p112 = scmp.ne.s32.totalorder %s98, %s99
      %p113 = scmp.eq.s32.totalorder %s23, 1
      %p114 = por %p112, %p113
      %p116 = scmp.ne.s32.totalorder %s99, %s115
      %p117 = scmp.eq.s32.totalorder %s23, 0
      %p118 = por %p116, %p117
      %p119 = scmp.le.s32.totalorder 1, %s17
      %p120 = scmp.lt.s32.totalorder %s17, 3
      %p121 = pnand %p119, %p120
      %p122 = pneg %p121
      // Predicated region
      $region9: #{dab_forward.1} parent=5 // pred_check
        _
      $region10: #{dab_forward.1} parent=5 // pred_check_branch
        %124 = sbr.rel (%p121) target = $region12
      $region11: #{dab_forward.1} parent=5 // pred_region
        %s125 = ssub.s32 %s17, 1
        // Predicated region
        $region13: #{dab_forward.1} parent=11 // pred_check
          %p126 = pneg %p38
        $region14: #{dab_forward.1} parent=11 // pred_check_branch
          %128 = sbr.rel (%p126) target = $region16
        $region15: #{dab_forward.1} parent=11 // pred_region
          %s130 = ssub.s32 32, 32
          %131 = vsyncadd [#allocation7], %s130
          %s133 = sshll.u32 %s0, 4
          %s134 = int_to_ptr.vmem [resolvable:$true] %s133
          %136 = dma.vmem_to_smem %s134, 32, [#allocation4], [#allocation7]
        $region16: #{dab_forward.1} parent=11 // pred_fallthru
          _
        // Predicated region
        $region17: #{dab_forward.1} parent=11 // pred_check
          %p137 = pneg %p59
        $region18: #{dab_forward.1} parent=11 // pred_check_branch
          %139 = sbr.rel (%p137) target = $region20
        $region19: #{dab_forward.1} parent=11 // pred_region
          %s141 = ssub.s32 16, 16
          %142 = vsyncadd [#allocation9], %s141
          %s144 = sshll.u32 %s1, 4
          %s145 = int_to_ptr.vmem [resolvable:$true] %s144
          %147 = dma.vmem_to_smem %s145, 16, [#allocation8], [#allocation9]
        $region20: #{dab_forward.1} parent=11 // pred_fallthru
          _
      $region12: #{dab_forward.1} parent=5 // pred_fallthru
        _
      %p148 = scmp.lt.s32.totalorder %s17, 2
      // Predicated region
      $region21: #{dab_forward.1} parent=5 // pred_check
        %p149 = pneg %p148
      $region22: #{dab_forward.1} parent=5 // pred_check_branch
        %151 = sbr.rel (%p149) target = $region24
      $region23: #{dab_forward.1} parent=5 // pred_region
        // Predicated region
        $region25: #{dab_forward.1} parent=23 // pred_check
          %p152 = pneg %p79
        $region26: #{dab_forward.1} parent=23 // pred_check_branch
          %154 = sbr.rel (%p152) target = $region28
        $region27: #{dab_forward.1} parent=23 // pred_region
          %s155 = sand.u32 %s69, 1
          %s156 = scalar_lea.sflag [#allocation5], %s155
          %s157 = sand.u32 %s69, 1
          %s158 = smul.addr %s157, 16
          %s159 = scalar_lea.vmem [#allocation10], %s158
          %s161 = ssub.s32 256, 256
          %162 = vsyncadd %s156, %s161
          %s163 = smul.addr %s17, 2
          %s164 = smul.addr %s163, 128
          %s165 = scalar_lea.hbm %s2, %s164
          %s166 = sshll.u32 %s159, 4
          %s167 = int_to_ptr.vmem [resolvable:$true] %s166
          %172 = dma.hbm_to_vmem [thread:$0]  %s165, 256, %s167, %s156, 128, 128, 8
        $region28: #{dab_forward.1} parent=23 // pred_fallthru
          _
      $region24: #{dab_forward.1} parent=5 // pred_fallthru
        _
      %p173 = scmp.le.s32.totalorder 1, %s17
      %p174 = scmp.lt.s32.totalorder %s17, 3
      %p175 = pnand %p173, %p174
      %p176 = pneg %p175
      // Predicated region
      $region29: #{dab_forward.1} parent=5 // pred_check
        _
      $region30: #{dab_forward.1} parent=5 // pred_check_branch
        %178 = sbr.rel (%p175) target = $region32
      $region31: #{dab_forward.1} parent=5 // pred_region
        %s179 = ssub.s32 %s17, 1
        // Predicated region
        $region33: #{dab_forward.1} parent=31 // pred_check
          %p180 = pneg %p38
        $region34: #{dab_forward.1} parent=31 // pred_check_branch
          %182 = sbr.rel (%p180) target = $region36
        $region35: #{dab_forward.1} parent=31 // pred_region
          %183 = dma.done [#allocation7], 32
        $region36: #{dab_forward.1} parent=31 // pred_fallthru
          _
        // Predicated region
        $region37: #{dab_forward.1} parent=31 // pred_check
          %p184 = pneg %p59
        $region38: #{dab_forward.1} parent=31 // pred_check_branch
          %186 = sbr.rel (%p184) target = $region40
        $region39: #{dab_forward.1} parent=31 // pred_region
          %187 = dma.done [#allocation9], 16
        $region40: #{dab_forward.1} parent=31 // pred_fallthru
          _
        %s188 = sand.u32 %s72, 1
        %s189 = scalar_lea.sflag [#allocation5], %s188
        %s190 = sand.u32 %s72, 1
        %s191 = smul.addr %s190, 16
        %s192 = scalar_lea.vmem [#allocation10], %s191
        // Predicated region
        $region41: #{dab_forward.1} parent=31 // pred_check
          %p193 = pneg %p85
        $region42: #{dab_forward.1} parent=31 // pred_check_branch
          %195 = sbr.rel (%p193) target = $region44
        $region43: #{dab_forward.1} parent=31 // pred_region
          %196 = dma.done %s189, 256
        $region44: #{dab_forward.1} parent=31 // pred_fallthru
          _
        %197 = sfence
        %p198 = pneg %p38
        %p199 = pneg %p35
        %p200 = pneg %p59
        %p201 = pneg %p56
        %s202 = sand.u32 %s72, 1
        %s203 = scalar_lea.sflag [#allocation5], %s202
        %s204 = sand.u32 %s72, 1
        %s205 = smul.addr %s204, 16
        %s206 = scalar_lea.vmem [#allocation10], %s205
        %p207 = pneg %p85
        %p208 = pneg %p82
        %p209 = pneg %p111
        %p210 = pneg %p108
        %s211 = sand.u32 %s98, 1
        %s212 = scalar_lea.sflag [#allocation6], %s211
        %s213 = sand.u32 %s98, 1
        %s214 = smul.addr %s213, 16
        %s215 = scalar_lea.vmem [#allocation11], %s214
        %s216 = sld [smem:[#allocation8]]
        %s217 = sld [smem:[#allocation8 + $0x1]]
        %vm218 = vcmask 1047680
        %219 = vst.msk [vmem:[#allocation2] sm:$0xff] %vm218, 0.0
        %220 = vst.msk [vmem:[#allocation2 + $0x8] sm:$0xff] %vm218, 0.0
        %vm221 = vcmask 1041536
        %222 = vst.msk [vmem:[#allocation2 + $0x10] sm:$0x3] %vm221, 0.0
        %vm223 = vcmask 122880
        %224 = vst.msk [vmem:[#allocation2] sm:$0x1] %vm223, 0.0
        %225 = vst.msk [vmem:[#allocation2 + $0x11] sm:$0x1] %vm223, 0.0
        %v226 = vld [vmem:[%s192] sm:$0xff]
        %v227 = vld [vmem:[%s192 + $0x8] sm:$0xff]
        %vm228 = vcmask 130048
        %229 = vst.msk [vmem:[#allocation2 + $0x1] sm:$0xff] %vm228, %v226
        %230 = vst.msk [vmem:[#allocation2 + $0x9] sm:$0xff] %vm228, %v227
        %v231 = vld [vmem:[#allocation2] sm:$0xff]
        %v232 = vld [vmem:[#allocation2 + $0x8] sm:$0xff]
        %v233 = vld [vmem:[#allocation2 + $0x10] sm:$0x3]
        %234 = vrot.lane.b32.xlu0 %v231, 1
        %v235 = vpop.permute.xlu0 %234
        %236 = vrot.lane.b32.xlu0 %v232, 1
        %v237 = vpop.permute.xlu0 %236
        %238 = vrot.lane.b32.xlu0 %v233, 1
        %v239 = vpop.permute.xlu0 %238
        %240 = vst [vmem:[#allocation3] sm:$0xff] %v235
        %241 = vst [vmem:[#allocation3 + $0x8] sm:$0xff] %v237
        %242 = vst [vmem:[#allocation3 + $0x10] sm:$0x3] %v239
        %243 = vrot.lane.b32.xlu0 %v231, 127
        %v244 = vpop.permute.xlu0 %243
        %245 = vrot.lane.b32.xlu0 %v232, 127
        %v246 = vpop.permute.xlu0 %245
        %247 = vrot.lane.b32.xlu0 %v233, 127
        %v248 = vpop.permute.xlu0 %247
        %s249 = scalar_lea.vmem [#allocation3], 24
        %250 = vst [vmem:[%s249] sm:$0xff] %v244
        %251 = vst [vmem:[%s249 + $0x8] sm:$0xff] %v246
        %252 = vst [vmem:[%s249 + $0x10] sm:$0x3] %v248
        %s253 = smul.u32 %s22, 128
        %s254 = sld [smem:[#allocation4 + %s253]]
        %v255 = vld [vmem:[#allocation3] sm:$0xff]
        %v256 = vld [vmem:[#allocation3 + $0x8] sm:$0xff]
        %v257 = vstv %s254
        %v258 = vmul.f32 %v255, %v257
        %v259 = vmul.f32 %v256, %v257
        %s260 = sadd.s32 %s253, 1
        %s261 = sld [smem:[#allocation4 + %s260]]
        %v262 = vld [vmem:[#allocation2] sm:$0xff]
        %v263 = vld [vmem:[#allocation2 + $0x8] sm:$0xff]
        %v264 = vstv %s261
        %v265 = vmul.f32 %v262, %v264
        %v266 = vmul.f32 %v263, %v264
        %s267 = sadd.s32 %s253, 2
        %s268 = sld [smem:[#allocation4 + %s267]]
        %v269 = vld [vmem:[%s249] sm:$0xff]
        %v270 = vld [vmem:[%s249 + $0x8] sm:$0xff]
        %v271 = vstv %s268
        %v272 = vmul.f32 %v269, %v271
        %v273 = vmul.f32 %v270, %v271
        %s274 = sadd.s32 %s253, 3
        %s275 = sld [smem:[#allocation4 + %s274]]
        %v276 = vld [vmem:[#allocation3 + $0x1] sm:$0xff]
        %v277 = vld [vmem:[#allocation3 + $0x9] sm:$0xff]
        %v278 = vstv %s275
        %v279 = vmul.f32 %v276, %v278
        %v280 = vmul.f32 %v277, %v278
        %s281 = sadd.s32 %s253, 4
        %s282 = sld [smem:[#allocation4 + %s281]]
        %v283 = vld [vmem:[#allocation2 + $0x1] sm:$0xff]
        %v284 = vld [vmem:[#allocation2 + $0x9] sm:$0xff]
        %v285 = vstv %s282
        %v286 = vmul.f32 %v283, %v285
        %v287 = vmul.f32 %v284, %v285
        %v288 = vadd.f32 %v258, %v286
        %v289 = vadd.f32 %v259, %v287
        %s290 = sadd.s32 %s253, 5
        %s291 = sld [smem:[#allocation4 + %s290]]
        %v292 = vld [vmem:[%s249 + $0x1] sm:$0xff]
        %v293 = vld [vmem:[%s249 + $0x9] sm:$0xff]
        %v294 = vstv %s291
        %v295 = vmul.f32 %v292, %v294
        %v296 = vmul.f32 %v293, %v294
        %v297 = vadd.f32 %v265, %v295
        %v298 = vadd.f32 %v266, %v296
        %s299 = sadd.s32 %s253, 6
        %s300 = sld [smem:[#allocation4 + %s299]]
        %v301 = vld [vmem:[#allocation3 + $0x2] sm:$0xff]
        %v302 = vld [vmem:[#allocation3 + $0xa] sm:$0xff]
        %v303 = vstv %s300
        %v304 = vmul.f32 %v301, %v303
        %v305 = vmul.f32 %v302, %v303
        %v306 = vadd.f32 %v272, %v304
        %v307 = vadd.f32 %v273, %v305
        %s308 = sadd.s32 %s253, 7
        %s309 = sld [smem:[#allocation4 + %s308]]
        %v310 = vld [vmem:[#allocation2 + $0x2] sm:$0xff]
        %v311 = vld [vmem:[#allocation2 + $0xa] sm:$0xff]
        %v312 = vstv %s309
        %v313 = vmul.f32 %v310, %v312
        %v314 = vmul.f32 %v311, %v312
        %v315 = vadd.f32 %v279, %v313
        %v316 = vadd.f32 %v280, %v314
        %s317 = sadd.s32 %s253, 8
        %s318 = sld [smem:[#allocation4 + %s317]]
        %v319 = vld [vmem:[%s249 + $0x2] sm:$0xff]
        %v320 = vld [vmem:[%s249 + $0xa] sm:$0xff]
        %v321 = vstv %s318
        %v322 = vmul.f32 %v319, %v321
        %v323 = vmul.f32 %v320, %v321
        %v324 = vadd.f32 %v288, %v322
        %v325 = vadd.f32 %v289, %v323
        %v326 = vadd.f32 %v324, %v297
        %v327 = vadd.f32 %v325, %v298
        %v328 = vadd.f32 %v326, %v306
        %v329 = vadd.f32 %v327, %v307
        %v330 = vadd.f32 %v328, %v315
        %v331 = vadd.f32 %v329, %v316
        %vm332 = vcmp.ge.f32.partialorder %v330, 0.0
        %vm333 = vcmp.ge.f32.partialorder %v331, 0.0
        %v334 = vmul.f32 %v330, 0.1
        %v335 = vmul.f32 %v331, 0.1
        %v336 = vsel %vm332, %v330, %v334
        %v337 = vsel %vm333, %v331, %v335
        %v338 = vstv %s216
        %v339 = vmul.f32 %v338, %v336
        %v340 = vmul.f32 %v338, %v337
        %v341 = vstv %s217
        %v342 = vadd.f32 %v339, %v341
        %v343 = vadd.f32 %v340, %v341
        %344 = vst.msk [vmem:[%s215] sm:$0xff] %vm228, %v342
        %345 = vst.msk [vmem:[%s215 + $0x8] sm:$0xff] %vm228, %v343
        %s346 = sand.u32 %s98, 1
        %s347 = scalar_lea.sflag [#allocation6], %s346
        %s348 = sand.u32 %s98, 1
        %s349 = smul.addr %s348, 16
        %s350 = scalar_lea.vmem [#allocation11], %s349
        // Predicated region
        $region45: #{dab_forward.1} parent=31 // pred_check
          %p351 = pneg %p108
        $region46: #{dab_forward.1} parent=31 // pred_check_branch
          %353 = sbr.rel (%p351) target = $region48
        $region47: #{dab_forward.1} parent=31 // pred_region
          %s355 = ssub.s32 256, 256
          %356 = vsyncadd %s347, %s355
          %s357 = smul.addr %s22, 2
          %s358 = smul.addr %s357, 128
          %s359 = scalar_lea.hbm %s3, %s358
          %s360 = sshll.u32 %s350, 4
          %s361 = int_to_ptr.vmem [resolvable:$true] %s360
          %366 = dma.vmem_to_hbm [thread:$0]  %s361, 256, %s359, %s347, 128, 128, 8
        $region48: #{dab_forward.1} parent=31 // pred_fallthru
          _
      $region32: #{dab_forward.1} parent=5 // pred_fallthru
        _
      %p367 = scmp.le.s32.totalorder 2, %s17
      // Predicated region
      $region49: #{dab_forward.1} parent=5 // pred_check
        %p368 = pneg %p367
      $region50: #{dab_forward.1} parent=5 // pred_check_branch
        %370 = sbr.rel (%p368) target = $region52
      $region51: #{dab_forward.1} parent=5 // pred_region
        %s371 = ssub.s32 %s17, 2
        // Predicated region
        $region53: #{dab_forward.1} parent=51 // pred_check
          %p372 = pneg %p114
        $region54: #{dab_forward.1} parent=51 // pred_check_branch
          %374 = sbr.rel (%p372) target = $region56
        $region55: #{dab_forward.1} parent=51 // pred_region
          %s375 = sand.u32 %s99, 1
          %s376 = scalar_lea.sflag [#allocation6], %s375
          %s377 = sand.u32 %s99, 1
          %s378 = smul.addr %s377, 16
          %s379 = scalar_lea.vmem [#allocation11], %s378
          %380 = dma.done %s376, 256
        $region56: #{dab_forward.1} parent=51 // pred_fallthru
          _
      $region52: #{dab_forward.1} parent=5 // pred_fallthru
        _
    $region6: #{dab_forward.1} parent=1 // loop_footer
      %s21 = sadd.s32 1, %s17
    $region7: #{dab_forward.1} parent=1 // loop_footer_branch
      %16 = sbr.rel target = $region3
    $region8: #{dab_forward.1} parent=1 // loop_exit
      _
    %381 = vsyncpa [#allocation5], 1
    %s382 = scalar_lea.sflag [#allocation5], 1
    %383 = vsyncpa %s382, 1
    %384 = vsyncpa [#allocation6], 1
    %s385 = scalar_lea.sflag [#allocation6], 1
    %386 = vsyncpa %s385, 1
    %387 = vsyncpa [#allocation7], 1
    %s388 = scalar_lea.sflag [#allocation7], 1
    %389 = vsyncpa %s388, 1
    %390 = vsyncpa [#allocation9], 1

</llo_original>
